<compile_context>
chip_gen: v5e
topology: v5e:2x2
jax: 0.10.0
libtpu: 0.0.40
codegen_flags: <defaults>
</compile_context>

<pallas_src>
import jax
import jax.numpy as jnp
from jax.experimental import pallas as pl
from jax.experimental.pallas import tpu as pltpu


def _round_up(x, m):
    return (x + m - 1) // m * m


# ---------------------------------------------------------------------------
# Fused two-head projection kernel (lane-dense output):
#   o[0, n] = h[n, :] @ w_x   + b_x
#   o[1, n] = h[n, :] @ w_lam + b_lam
# ---------------------------------------------------------------------------
def _var_const_head_kernel(h_ref, w_ref, b_ref, o_ref):
    # h_ref: (TILE_M, D)   w_ref: (D, 2)   b_ref: (2, 1)   o_ref: (2, TILE_M)
    acc = jnp.dot(h_ref[...], w_ref[...],
                  preferred_element_type=jnp.float32)      # (TILE_M, 2)
    # Transpose only the tiny result (XLU slot is idle; kernel is HBM-bound)
    # so the store is a full 128-lane unmasked write.
    o_ref[...] = acc.T + b_ref[...]                         # (2, TILE_M)


def _choose_tile_m(N, D):
    """Row tile sized by a ~4 MiB padded-VMEM byte budget, multiple of 128."""
    padded_row_bytes = max(D, 128) * 4          # f32 + 128-lane padding
    tile = max(512, (4 << 20) // padded_row_bytes)
    tile = _round_up(tile, 128)
    if tile < N:
        return tile                              # grid >= 2 automatically
    if N >= 2048:
        # Big enough to split: keep >= 2 grid steps so the "parallel" axis can
        # feed both TensorCores on v7x instead of one giant serial tile.
        return _round_up(pl.cdiv(N, 2), 128)
    return N                                     # small problem: one full block


def var_const_head_projections(h, w_heads, b_heads, *, tile_m=None):
    """(N, D) @ (D, 2) + (2, 1) -> (2, N), row-tiled over N, lane-dense out."""
    N, D = h.shape
    if tile_m is None:
        tile_m = _choose_tile_m(N, D)

    grid = (pl.cdiv(N, tile_m),)

    # VMEM budget: double-buffered input & output blocks + the tiny weights.
    in_buf = tile_m * max(D, 128) * 4            # (tile_m, D) padded to 128 lanes
    out_buf = tile_m * 8 * 4                     # (2, tile_m) pads to 8 sublanes
    w_buf = _round_up(D, 8) * 128 * 4
    vmem_bytes = 2 * (in_buf + out_buf) + 2 * w_buf + (2 << 20)   # + headroom
    vmem_limit = int(min(max(vmem_bytes, 24 << 20), 48 << 20))    # v7x-safe cap

    cost = pl.CostEstimate(
        flops=4 * N * D,                                   # two fused 1-wide heads
        bytes_accessed=4 * N * D + 8 * N + 8 * D + 8,
        transcendentals=0,
    )

    return pl.pallas_call(
        _var_const_head_kernel,
        grid=grid,
        out_shape=jax.ShapeDtypeStruct((2, N), jnp.float32),
        in_specs=[
            pl.BlockSpec((tile_m, D), lambda i: (i, 0)),   # h: row-tiled stream
            pl.BlockSpec((D, 2), lambda i: (0, 0)),        # fused head weights
            pl.BlockSpec((2, 1), lambda i: (0, 0)),        # fused head biases
        ],
        out_specs=pl.BlockSpec((2, tile_m), lambda i: (0, i)),
        compiler_params=pltpu.CompilerParams(
            dimension_semantics=("parallel",),             # rows across v7x's 2 TCs
            vmem_limit_bytes=vmem_limit,
        ),
        cost_estimate=cost,
    )(h, w_heads, b_heads)


def var_const_head(h, w_x, b_x, w_lam, b_lam, var_mask, constr_mask):
    """Full VarConstHead.forward.

    h            : (N, D) float32 node embeddings
    w_x, w_lam   : (D, 1) float32  (nn.Linear weight, transposed to column form)
    b_x, b_lam   : (1,)   float32  (nn.Linear bias)
    var_mask, constr_mask : (N,) bool
    """
    w_heads = jnp.concatenate([w_x, w_lam], axis=1)                       # (D, 2)
    b_heads = jnp.stack([b_x.reshape(()), b_lam.reshape(())])[:, None]    # (2, 1)
    out = var_const_head_projections(h, w_heads, b_heads)                 # (2, N)

    # TODO(synk): boolean-mask selection has a data-dependent output shape and is
    #             not jit-compatible; under jit use precomputed integer indices
    #             (jnp.nonzero(mask, size=K) + jnp.take) or return the dense (2, N).
    x_hat = out[0][var_mask]          # == to_xhat(h[var_mask]).squeeze(-1)
    lam_hat = out[1][constr_mask]     # == to_lam(h[constr_mask]).squeeze(-1)
    return x_hat, lam_hat


if __name__ == "__main__":
    key = jax.random.PRNGKey(0)
    k_h, k_wx, k_wl, k_bx, k_bl, k_h2 = jax.random.split(key, 6)

    # ---- test 1: tiny problem (single full block, matches module's shapes) ----
    N, D = 24, 32  # 24 nodes, d_model = 32
    h = jax.random.normal(k_h, (N, D), jnp.float32)
    w_x = jax.random.normal(k_wx, (D, 1), jnp.float32) * 0.1
    w_lam = jax.random.normal(k_wl, (D, 1), jnp.float32) * 0.1
    b_x = jax.random.normal(k_bx, (1,), jnp.float32) * 0.1
    b_lam = jax.random.normal(k_bl, (1,), jnp.float32) * 0.1
    var_mask = (jnp.arange(N) % 3) != 0
    constr_mask = ~var_mask

    x_hat, lam_hat = var_const_head(h, w_x, b_x, w_lam, b_lam,
                                    var_mask, constr_mask)
    jax.block_until_ready((x_hat, lam_hat))

    x_ref = (h[var_mask] @ w_x)[:, 0] + b_x[0]
    l_ref = (h[constr_mask] @ w_lam)[:, 0] + b_lam[0]
    assert x_hat.shape == (int(var_mask.sum()),)
    assert lam_hat.shape == (int(constr_mask.sum()),)
    assert jnp.allclose(x_hat, x_ref, atol=1e-5), "x_hat mismatch"
    assert jnp.allclose(lam_hat, l_ref, atol=1e-5), "lam_hat mismatch"

    # ---- test 2: multi-block grid with a partial last tile (grid = 3) ----
    N2 = 600
    h2 = jax.random.normal(k_h2, (N2, D), jnp.float32)
    w_heads = jnp.concatenate([w_x, w_lam], axis=1)
    b_heads = jnp.stack([b_x[0], b_lam[0]])[:, None]
    out2 = var_const_head_projections(h2, w_heads, b_heads, tile_m=256)
    jax.block_until_ready(out2)
    ref2 = (h2 @ w_heads + jnp.concatenate([b_x, b_lam])[None, :]).T
    assert out2.shape == (2, N2)
    assert jnp.allclose(out2, ref2, atol=1e-5), "tiled projection mismatch"

    print("KERNEL_OK")
</pallas_src>

<mosaic_0001>
module attributes {stable_mosaic.version = 11 : i64} {
  func.func @_var_const_head_kernel(%arg0: i32, %arg1: memref<24x32xf32, #tpu.memory_space<vmem>>, %arg2: memref<32x2xf32, #tpu.memory_space<vmem>>, %arg3: memref<2x1xf32, #tpu.memory_space<vmem>>, %arg4: memref<2x24xf32, #tpu.memory_space<vmem>>) attributes {dimension_semantics = [#tpu.dimension_semantics<parallel>], iteration_bounds = array<i64: 1>, scalar_prefetch = 0 : i64, scratch_operands = 0 : i64, tpu.core_type = #tpu.core_type<tc>, window_params = [{transform_indices = @transform_0, window_bounds = array<i64: 24, 32>}, {pipeline_mode = #tpu.pipeline_mode<synchronous>, transform_indices = @transform_1, window_bounds = array<i64: 32, 2>}, {pipeline_mode = #tpu.pipeline_mode<synchronous>, transform_indices = @transform_2, window_bounds = array<i64: 2, 1>}, {transform_indices = @transform_3, window_bounds = array<i64: 2, 24>}]} {
    %c0 = arith.constant 0 : index
    %c0_0 = arith.constant 0 : index
    %0 = vector.load %arg1[%c0, %c0_0] : memref<24x32xf32, #tpu.memory_space<vmem>>, vector<24x32xf32>
    %c0_1 = arith.constant 0 : index
    %c0_2 = arith.constant 0 : index
    %1 = vector.load %arg2[%c0_1, %c0_2] : memref<32x2xf32, #tpu.memory_space<vmem>>, vector<32x2xf32>
    %cst = arith.constant dense<0.000000e+00> : vector<24x2xf32>
    %2 = tpu.matmul %0, %1, %cst {dimension_numbers = #tpu.dot_dimension_numbers<[1], [0], [0], [1], [0, 0, 1, 1], [], []>} : vector<24x32xf32>, vector<32x2xf32>, vector<24x2xf32> -> vector<24x2xf32>
    %3 = tpu.transpose %2, [1, 0] : vector<24x2xf32> -> vector<2x24xf32>
    %c0_3 = arith.constant 0 : index
    %c0_4 = arith.constant 0 : index
    %4 = vector.load %arg3[%c0_3, %c0_4] : memref<2x1xf32, #tpu.memory_space<vmem>>, vector<2x1xf32>
    %5 = vector.broadcast %4 : vector<2x1xf32> to vector<2x24xf32>
    %6 = arith.addf %3, %5 : vector<2x24xf32>
    %c0_5 = arith.constant 0 : index
    %c0_6 = arith.constant 0 : index
    %7 = vector.load %arg4[%c0_5, %c0_6] : memref<2x24xf32, #tpu.memory_space<vmem>>, vector<2x24xf32>
    tpu.vector_store %arg4[%c0_5, %c0_6], %6 {strides = array<i32>} : memref<2x24xf32, #tpu.memory_space<vmem>>, vector<2x24xf32>,
    return
  }
  func.func @transform_0(%arg0: i32) -> (i32, i32) {
    %c0_i32 = arith.constant 0 : i32
    %c0_i32_0 = arith.constant 0 : i32
    return %arg0, %c0_i32 : i32, i32
  }
  func.func @transform_1(%arg0: i32) -> (i32, i32) {
    %c0_i32 = arith.constant 0 : i32
    %c0_i32_0 = arith.constant 0 : i32
    %c0_i32_1 = arith.constant 0 : i32
    return %c0_i32, %c0_i32_0 : i32, i32
  }
  func.func @transform_2(%arg0: i32) -> (i32, i32) {
    %c0_i32 = arith.constant 0 : i32
    %c0_i32_0 = arith.constant 0 : i32
    %c0_i32_1 = arith.constant 0 : i32
    return %c0_i32, %c0_i32_0 : i32, i32
  }
  func.func @transform_3(%arg0: i32) -> (i32, i32) {
    %c0_i32 = arith.constant 0 : i32
    %c0_i32_0 = arith.constant 0 : i32
    return %c0_i32, %arg0 : i32, i32
  }
}

</mosaic_0001>

<llo_original>
// kernel: tpu_custom_call.1
$region0: #{tpu_custom_call.1}
  #allocation0 [shape = 'u32[]', space=smem, size = 0x4, offset = 0x4, fixed_abs, tag = 'smem constant byte address 0x4 - core index']
  #allocation1 [shape = 'u32[72,128]{1,0:T(1,128)}', space=vmem, size = 0x9000, scoped, tag = 'internal scratch']
  %s0 = inlined_call_operand.vmem [shape: f32[24,32], index: 0, kind: input, shape index: {}]
  %s1 = inlined_call_operand.vmem [shape: f32[32,2], index: 1, kind: input, shape index: {}]
  %s2 = inlined_call_operand.vmem [shape: f32[2,1], index: 2, kind: input, shape index: {}]
  %s3 = inlined_call_operand.hbm [shape: f32[2,24], index: 3, kind: output, shape index: {}]
  %s4 = sld [smem:[#allocation0]]
  $region22: #{tpu_custom_call.1} parent=0
    _
  %s6 = ssub.s32 1, %s4
  %s7 = scalar_select 0, %s6, %s4
  $region1: #{tpu_custom_call.1} parent=0
    #allocation2 [shape = 'u8[1024]{0}', space=vmem, size = 0x400, scoped, tag = 'output window, operand 0, single buffered']
    #allocation3 [shape = 's32[1]{0}', space=sflag, size = 0x4, scoped, tag = 'scoped memory for tpu_custom_call.1']
    %8 = vsyncpa [#allocation3], 0
    // Predicated region
    $region2: #{tpu_custom_call.1} parent=1 // pred_check
      _
    $region3: #{tpu_custom_call.1} parent=1 // pred_check_branch
      %10 = sbr.rel (0) target = $region5
    $region4: #{tpu_custom_call.1} parent=1 // pred_region
      _
    $region5: #{tpu_custom_call.1} parent=1 // pred_fallthru
      _
    // Predicated region
    $region6: #{tpu_custom_call.1} parent=1 // pred_check
      _
    $region7: #{tpu_custom_call.1} parent=1 // pred_check_branch
      %12 = sbr.rel (0) target = $region9
    $region8: #{tpu_custom_call.1} parent=1 // pred_region
      _
    $region9: #{tpu_custom_call.1} parent=1 // pred_fallthru
      _
    // Predicated region
    $region10: #{tpu_custom_call.1} parent=1 // pred_check
      _
    $region11: #{tpu_custom_call.1} parent=1 // pred_check_branch
      %14 = sbr.rel (0) target = $region13
    $region12: #{tpu_custom_call.1} parent=1 // pred_region
      _
    $region13: #{tpu_custom_call.1} parent=1 // pred_fallthru
      _
    %v15 = vld [vmem:[%s0] sm:$0xff]
    %v16 = vld [vmem:[%s0 + $0x8] sm:$0xff]
    %v17 = vld [vmem:[%s0 + $0x10] sm:$0xff]
    %v18 = vld [vmem:[%s1] sm:$0xff]
    %v19 = vld [vmem:[%s1 + $0x8] sm:$0xff]
    %v20 = vld [vmem:[%s1 + $0x10] sm:$0xff]
    %v21 = vld [vmem:[%s1 + $0x18] sm:$0xff]
    %vm22 = vcmask 261120
    %v24 = vsel %vm22, %v15, 0
    %v27 = vsel %vm22, %v16, 0
    %v30 = vsel %vm22, %v17, 0
    %32 = vmatpush.msra.mxu0 0.0
    %33 = vmatpush.msra.mxu0 0.0
    %34 = vmatpush.msra.mxu0 0.0
    %35 = vmatpush.msra.mxu0 0.0
    %36 = vmatpush.msra.mxu0 0.0
    %37 = vmatpush.msra.mxu0 0.0
    %38 = vmatpush.msra.mxu0 0.0
    %39 = vmatpush.msra.mxu0 0.0
    %40 = vmatpush.msra.mxu0 0.0
    %41 = vmatpush.msra.mxu0 0.0
    %42 = vmatpush.msra.mxu0 0.0
    %43 = vmatpush.msra.mxu0 0.0
    %44 = vmatpush.msra.mxu0 %v21
    %45 = vmatpush.msra.mxu0 %v20
    %46 = vmatpush.msra.mxu0 %v19
    %47 = vmatpush.msra.mxu0 %v18
    %48 = vmatmul.f32.gmra.mxu0 %v24
    %v49 = vpop.f32.mrf.mxu0
    %v50 = vadd.f32 0.0, %v49
    %51 = vmatmul.f32.gmra.mxu0 %v27
    %v52 = vpop.f32.mrf.mxu0
    %v53 = vadd.f32 0.0, %v52
    %54 = vmatmul.f32.gmra.mxu0 %v30
    %v55 = vpop.f32.mrf.mxu0
    %v56 = vadd.f32 0.0, %v55
    %57 = vdwg.mxu0
    %58 = vxpose.xlu0.b32.start [1/16] %v50, 128
    %59 = vxpose.xlu0.b32.cont [2/16] %v53, 128
    %60 = vxpose.xlu0.b32.cont [3/16] %v56, 128
    %61 = vxpose.xlu0.b32.cont [4/16] 0.0, 128
    %62 = vxpose.xlu0.b32.cont [5/16] 0.0, 128
    %63 = vxpose.xlu0.b32.cont [6/16] 0.0, 128
    %64 = vxpose.xlu0.b32.cont [7/16] 0.0, 128
    %65 = vxpose.xlu0.b32.cont [8/16] 0.0, 128
    %66 = vxpose.xlu0.b32.cont [9/16] 0.0, 128
    %67 = vxpose.xlu0.b32.cont [10/16] 0.0, 128
    %68 = vxpose.xlu0.b32.cont [11/16] 0.0, 128
    %69 = vxpose.xlu0.b32.cont [12/16] 0.0, 128
    %70 = vxpose.xlu0.b32.cont [13/16] 0.0, 128
    %71 = vxpose.xlu0.b32.cont [14/16] 0.0, 128
    %72 = vxpose.xlu0.b32.cont [15/16] 0.0, 128
    %73 = vxpose.xlu0.b32.end [16/16] 0.0, 128
    %v74 = vpop.trf.xlu0
    %v75 = vpop.trf.xlu0
    %v76 = vpop.trf.xlu0
    %v77 = vpop.trf.xlu0
    %v78 = vpop.trf.xlu0
    %v79 = vpop.trf.xlu0
    %v80 = vpop.trf.xlu0
    %v81 = vpop.trf.xlu0
    %v82 = vpop.trf.xlu0
    %v83 = vpop.trf.xlu0
    %v84 = vpop.trf.xlu0
    %v85 = vpop.trf.xlu0
    %v86 = vpop.trf.xlu0
    %v87 = vpop.trf.xlu0
    %v88 = vpop.trf.xlu0
    %v89 = vpop.trf.xlu0
    %v90 = vld [vmem:[%s2] sm:$0x3]
    %92 = vset.pattern.permute.xlu0 0
    %93 = vperm.xlu0 %92, %v90
    %v94 = vpop.permute.xlu0 %93
    %v96 = vadd.f32 %v74, %v94
    %vm97 = vcmask 189440
    %98 = vst.msk [vmem:[#allocation2] sm:$0x3] %vm97, %v96
    // Predicated region
    $region14: #{tpu_custom_call.1} parent=1 // pred_check
      _
    $region15: #{tpu_custom_call.1} parent=1 // pred_check_branch
      %100 = sbr.rel (0) target = $region17
    $region16: #{tpu_custom_call.1} parent=1 // pred_region
      %102 = vsyncadd [#allocation3], 0
      %s104 = sshll.u32 [#allocation2], 4
      %s105 = int_to_ptr.vmem [resolvable:$true] %s104
      %s106 = sshll.u32 %s3, 4
      %s107 = int_to_ptr.hbm [resolvable:$true] %s106
      %109 = dma.vmem_to_hbm [thread:$0]  %s105, 32, %s107, [#allocation3]
    $region17: #{tpu_custom_call.1} parent=1 // pred_fallthru
      _
    // Predicated region
    $region18: #{tpu_custom_call.1} parent=1 // pred_check
      _
    $region19: #{tpu_custom_call.1} parent=1 // pred_check_branch
      %111 = sbr.rel (0) target = $region21
    $region20: #{tpu_custom_call.1} parent=1 // pred_region
      %113 = dma.done [#allocation3], 32
    $region21: #{tpu_custom_call.1} parent=1 // pred_fallthru
      _
    %114 = vsyncpa [#allocation3], 1

</llo_original>
